<compile_context>
chip_gen: v7x
topology: tpu7x:2x2x1
jax: 0.10.0
libtpu: 0.0.40
codegen_flags: <defaults>
</compile_context>

<pallas_src>
import jax
import jax.numpy as jnp
from jax.experimental import pallas as pl
from jax.experimental.pallas import tpu as pltpu


# ---------------------------------------------------------------------------
# Tiling constants
# ---------------------------------------------------------------------------
_LANE = 1024                     # lane-dense last dim (multiple of 128 -> unmasked vst)
_TILE_BYTES = 8 << 20            # 8 MiB per block buffer, regardless of dtype
_MIN_GRID_STEPS = 4              # keep both v7x TensorCores busy on large grads
_VMEM_LIMIT_BYTES = 40 << 20     # 4 double-buffered 8 MiB slabs (32 MiB) + headroom
_PALLAS_MIN_BYTES = 128 * 1024   # below this, plain JAX (fuses into neighbors)
# NOTE: in a full training graph where the cotangent is NOT already
# materialized, letting XLA fuse -lambda*g into its producer is cheaper than
# any standalone kernel; raise _PALLAS_MIN_BYTES in that setting.


def _round_up(x, m):
    return ((x + m - 1) // m) * m


# ---------------------------------------------------------------------------
# Kernel: o = (-lambda) * g, with -lambda held as a runtime SMEM scalar.
# ---------------------------------------------------------------------------
def _neg_scale_kernel(scale_ref, g_ref, o_ref):
    scale = scale_ref[0]  # f32 scalar == -lambda (kept f32 for low-prec grads)
    o_ref[...] = (g_ref[...].astype(jnp.float32) * scale).astype(o_ref.dtype)


def _pick_tile_rows(rows, itemsize):
    """Rows per block: ~8 MiB per buffer, dtype-scaled; grid >= 4 when possible."""
    max_rows = max(8, _TILE_BYTES // (_LANE * itemsize))
    if rows <= max_rows:
        return rows  # single full-extent block is always layout-legal
    rows_for_min_steps = _round_up(pl.cdiv(rows, _MIN_GRID_STEPS), 8)
    return max(8, min(max_rows, rows_for_min_steps))


# ---------------------------------------------------------------------------
# Backward wrapper
# ---------------------------------------------------------------------------
def _neg_scale_pallas(g, neg_lambda):
    orig_shape, orig_dtype = g.shape, g.dtype
    n = g.size
    rows = pl.cdiv(n, _LANE)
    aligned = (n % _LANE) == 0

    if aligned:
        g2d = g.reshape(rows, _LANE)              # free view, no pad / no slice later
    else:
        flat = jnp.pad(g.reshape(-1), (0, rows * _LANE - n))
        g2d = flat.reshape(rows, _LANE)

    tile_m = _pick_tile_rows(rows, g2d.dtype.itemsize)
    grid = (pl.cdiv(rows, tile_m),)               # ragged last block masked by Pallas
    scale = neg_lambda.astype(jnp.float32).reshape((1,))

    out2d = pl.pallas_call(
        _neg_scale_kernel,
        out_shape=jax.ShapeDtypeStruct(g2d.shape, g2d.dtype),
        grid_spec=pltpu.PrefetchScalarGridSpec(
            num_scalar_prefetch=1,
            grid=grid,
            in_specs=[pl.BlockSpec((tile_m, _LANE), lambda i, s: (i, 0))],
            out_specs=pl.BlockSpec((tile_m, _LANE), lambda i, s: (i, 0)),
        ),
        # scalar-prefetch arg is input 0, g2d is input 1 -> output aliases g2d.
        input_output_aliases={1: 0},
        compiler_params=pltpu.CompilerParams(
            # "parallel" lets v7x shard the row-grid across its 2 TensorCores.
            # If xprof shows one TC idle, switch to pltpu.CORE_PARALLEL.
            dimension_semantics=("parallel",),
            vmem_limit_bytes=_VMEM_LIMIT_BYTES,
        ),
    )(scale, g2d)

    if aligned:
        return out2d.reshape(orig_shape)
    return out2d.reshape(-1)[:n].reshape(orig_shape).astype(orig_dtype)


def _neg_scale(g, neg_lambda):
    # Small gradients: a standalone kernel can never beat XLA fusion here.
    if g.size == 0 or g.size * g.dtype.itemsize < _PALLAS_MIN_BYTES:
        return (g.astype(jnp.float32) * neg_lambda.astype(jnp.float32)).astype(g.dtype)
    return _neg_scale_pallas(g, neg_lambda)


# ---------------------------------------------------------------------------
# GradientReversalLayer equivalent (custom_vjp); lambda_ is a traced scalar.
# ---------------------------------------------------------------------------
@jax.custom_vjp
def _gradient_reversal(x, lambda_):
    # Forward is exactly identity: no kernel, no HBM round trip.
    return x


def _grl_fwd(x, lambda_):
    return x, lambda_


def _grl_bwd(lambda_, g):
    # PyTorch returns None for lambda's grad; in JAX we return a zero cotangent.
    return (_neg_scale(g, -lambda_), jnp.zeros_like(lambda_))


_gradient_reversal.defvjp(_grl_fwd, _grl_bwd)


def gradient_reversal(x, lambda_=1.0):
    """Forward: identity. Backward: cotangent * (-lambda_)."""
    return _gradient_reversal(x, jnp.asarray(lambda_, jnp.float32))


class GradientReversalLayer:
    """Mirrors the PyTorch module: forward identity, backward -> -lambda * grad."""

    def __init__(self, lambda_=1.0):
        self.lambda_ = float(lambda_)

    def __call__(self, x):
        return gradient_reversal(x, self.lambda_)


# ---------------------------------------------------------------------------
# Main
# ---------------------------------------------------------------------------
if __name__ == "__main__":
    key = jax.random.PRNGKey(0)
    k1, k2, k3 = jax.random.split(key, 3)

    layer = GradientReversalLayer(lambda_=1.0)

    # --- small NCHW tensor (matches the PyTorch module's typical input) -----
    x = jax.random.normal(k1, (2, 4, 16, 16), dtype=jnp.float32)
    y = layer(x)
    jax.block_until_ready(y)
    assert y.shape == x.shape and y.dtype == x.dtype
    assert bool(jnp.allclose(y, x))

    lam = 0.5
    grad_small = jax.grad(lambda a: jnp.sum(gradient_reversal(a, lam)))(x)
    jax.block_until_ready(grad_small)
    assert bool(jnp.allclose(grad_small, -lam * jnp.ones_like(x)))

    # --- larger, lane-aligned tensor: Pallas backward, no pad / no slice ----
    x_big = jax.random.normal(k2, (2, 8, 32, 128), dtype=jnp.float32)
    y_big = layer(x_big)
    jax.block_until_ready(y_big)
    assert bool(jnp.allclose(y_big, x_big))
    grad_big = jax.grad(lambda a: jnp.sum(gradient_reversal(a, lam)))(x_big)
    jax.block_until_ready(grad_big)
    assert bool(jnp.allclose(grad_big, -lam * jnp.ones_like(x_big)))

    # Same thing under jit (exercises the aliased-output path end to end).
    grad_big_jit = jax.jit(
        jax.grad(lambda a, l: jnp.sum(gradient_reversal(a, l)))
    )(x_big, jnp.float32(lam))
    jax.block_until_ready(grad_big_jit)
    assert bool(jnp.allclose(grad_big_jit, -lam * jnp.ones_like(x_big)))

    # --- odd-sized tensor: exercises the masked ragged-block + pad path -----
    x_odd = jax.random.normal(k3, (3, 7, 33, 65), dtype=jnp.float32)
    lam2 = 1.7
    grad_odd = jax.grad(lambda a: jnp.sum(gradient_reversal(a, lam2)))(x_odd)
    jax.block_until_ready(grad_odd)
    assert grad_odd.shape == x_odd.shape
    assert bool(jnp.allclose(grad_odd, -lam2 * jnp.ones_like(x_odd)))

    print("KERNEL_OK")
</pallas_src>

<mosaic_0001>
module attributes {stable_mosaic.version = 11 : i64} {
  func.func @_neg_scale_kernel(%arg0: i32, %arg1: memref<1xf32, #tpu.memory_space<smem>>, %arg2: memref<64x1024xf32, #tpu.memory_space<vmem>>, %arg3: memref<64x1024xf32, #tpu.memory_space<vmem>>) attributes {dimension_semantics = [#tpu.dimension_semantics<parallel>], iteration_bounds = array<i64: 1>, scalar_prefetch = 1 : i64, scratch_operands = 0 : i64, tpu.core_type = #tpu.core_type<tc>, window_params = [{transform_indices = @transform_0, window_bounds = array<i64: 64, 1024>}, {transform_indices = @transform_1, window_bounds = array<i64: 64, 1024>}]} {
    %c0 = arith.constant 0 : index
    %0 = memref.load %arg1[%c0] : memref<1xf32, #tpu.memory_space<smem>>
    %c0_0 = arith.constant 0 : index
    %c0_1 = arith.constant 0 : index
    %1 = vector.load %arg2[%c0_0, %c0_1] : memref<64x1024xf32, #tpu.memory_space<vmem>>, vector<64x1024xf32>
    %2 = vector.broadcast %0 : f32 to vector<64x1024xf32>
    %3 = arith.mulf %1, %2 : vector<64x1024xf32>
    %c0_2 = arith.constant 0 : index
    %c0_3 = arith.constant 0 : index
    %4 = vector.load %arg3[%c0_2, %c0_3] : memref<64x1024xf32, #tpu.memory_space<vmem>>, vector<64x1024xf32>
    tpu.vector_store %arg3[%c0_2, %c0_3], %3 {strides = array<i32>} : memref<64x1024xf32, #tpu.memory_space<vmem>>, vector<64x1024xf32>,
    return
  }
  func.func @transform_0(%arg0: i32, %arg1: memref<1xf32, #tpu.memory_space<smem>>) -> (i32, i32) {
    %c0_i32 = arith.constant 0 : i32
    %c0_i32_0 = arith.constant 0 : i32
    return %arg0, %c0_i32 : i32, i32
  }
  func.func @transform_1(%arg0: i32, %arg1: memref<1xf32, #tpu.memory_space<smem>>) -> (i32, i32) {
    %c0_i32 = arith.constant 0 : i32
    %c0_i32_0 = arith.constant 0 : i32
    return %arg0, %c0_i32 : i32, i32
  }
}

</mosaic_0001>

<llo_original>
// kernel: tpu_custom_call.1
$region0: #{tpu_custom_call.1}
  #allocation0 [shape = 'u32[]', space=smem, size = 0x4, offset = 0x4, fixed_abs, tag = 'smem constant byte address 0x4 - core index']
  #allocation1 [shape = 'u32[144,128]{1,0:T(1,128)}', space=vmem, size = 0x12000, scoped, tag = 'internal scratch']
  #allocation2 [shape = 's32[1]{0}', space=sflag, size = 0x4, scoped, tag = 'scoped memory for tpu_custom_call.1']
  #allocation3 [shape = 'f32[1]{0:T(128)S(6)}', space=smem, size = 0x200, scoped, tag = 'prefetched SMEM operand 0']
  %s0 = inlined_call_operand.<no memory space> [shape: f32[1], index: 0, kind: input, shape index: {}]
  %s1 = inlined_call_operand.hbm [shape: f32[64,1024], index: 1, kind: input, shape index: {}, may-alias: {1,2}]
  %s2 = inlined_call_operand.hbm [shape: f32[64,1024], index: 2, kind: output, shape index: {}, may-alias: {1,2}]
  %s3 = sld [smem:[#allocation0]]
  $region18: #{tpu_custom_call.1} parent=0
    _
  %s5 = ssub.s32 1, %s3
  %s6 = scalar_select 0, %s5, %s3
  %7 = sst [smem:[#allocation3]] %s0
  $region1: #{tpu_custom_call.1} parent=0
    #allocation4 [shape = 'u8[262144]{0}', space=vmem, size = 0x40000, scoped, tag = 'input window, operand 1, single buffered']
    #allocation5 [shape = 's32[1]{0}', space=sflag, size = 0x4, scoped, tag = 'scoped memory for tpu_custom_call.1']
    #allocation6 [shape = 's32[1]{0}', space=sflag, size = 0x4, scoped, tag = 'scoped memory for tpu_custom_call.1']
    #allocation7 [shape = 'u8[262144]{0}', space=vmem, size = 0x40000, scoped, tag = 'output window, operand 0, single buffered']
    %8 = vsyncpa [#allocation5], 0
    %9 = vsyncpa [#allocation6], 0
    // Predicated region
    $region2: #{tpu_custom_call.1} parent=1 // pred_check
      _
    $region3: #{tpu_custom_call.1} parent=1 // pred_check_branch
      %11 = sbr.rel (0) target = $region5
    $region4: #{tpu_custom_call.1} parent=1 // pred_region
      %s13 = ssub.s32 8192, 8192
      %14 = vsyncadd [#allocation5], %s13
      %s15 = sshll.u32 [#allocation4], 4
      %s16 = int_to_ptr.vmem [resolvable:$true] %s15
      %21 = dma.hbm_to_vmem [thread:$0]  %s1, 8192, %s16, [#allocation5], 1024, 1024, 64
    $region5: #{tpu_custom_call.1} parent=1 // pred_fallthru
      _
    // Predicated region
    $region6: #{tpu_custom_call.1} parent=1 // pred_check
      _
    $region7: #{tpu_custom_call.1} parent=1 // pred_check_branch
      %23 = sbr.rel (0) target = $region9
    $region8: #{tpu_custom_call.1} parent=1 // pred_region
      %24 = dma.done [#allocation5], 8192
    $region9: #{tpu_custom_call.1} parent=1 // pred_fallthru
      _
    %s25 = sld [smem:[#allocation3]]
    %v26 = vld [vmem:[#allocation4] sm:$0xff]
    %v27 = vld [vmem:[#allocation4 + $0x8] sm:$0xff]
    %v28 = vld [vmem:[#allocation4 + $0x10] sm:$0xff]
    %v29 = vld [vmem:[#allocation4 + $0x18] sm:$0xff]
    %v30 = vld [vmem:[#allocation4 + $0x20] sm:$0xff]
    %v31 = vld [vmem:[#allocation4 + $0x28] sm:$0xff]
    %v32 = vld [vmem:[#allocation4 + $0x30] sm:$0xff]
    %v33 = vld [vmem:[#allocation4 + $0x38] sm:$0xff]
    %v34 = vld [vmem:[#allocation4 + $0x40] sm:$0xff]
    %v35 = vld [vmem:[#allocation4 + $0x48] sm:$0xff]
    %v36 = vld [vmem:[#allocation4 + $0x50] sm:$0xff]
    %v37 = vld [vmem:[#allocation4 + $0x58] sm:$0xff]
    %v38 = vld [vmem:[#allocation4 + $0x60] sm:$0xff]
    %v39 = vld [vmem:[#allocation4 + $0x68] sm:$0xff]
    %v40 = vld [vmem:[#allocation4 + $0x70] sm:$0xff]
    %v41 = vld [vmem:[#allocation4 + $0x78] sm:$0xff]
    %v42 = vld [vmem:[#allocation4 + $0x80] sm:$0xff]
    %v43 = vld [vmem:[#allocation4 + $0x88] sm:$0xff]
    %v44 = vld [vmem:[#allocation4 + $0x90] sm:$0xff]
    %v45 = vld [vmem:[#allocation4 + $0x98] sm:$0xff]
    %v46 = vld [vmem:[#allocation4 + $0xa0] sm:$0xff]
    %v47 = vld [vmem:[#allocation4 + $0xa8] sm:$0xff]
    %v48 = vld [vmem:[#allocation4 + $0xb0] sm:$0xff]
    %v49 = vld [vmem:[#allocation4 + $0xb8] sm:$0xff]
    %v50 = vld [vmem:[#allocation4 + $0xc0] sm:$0xff]
    %v51 = vld [vmem:[#allocation4 + $0xc8] sm:$0xff]
    %v52 = vld [vmem:[#allocation4 + $0xd0] sm:$0xff]
    %v53 = vld [vmem:[#allocation4 + $0xd8] sm:$0xff]
    %v54 = vld [vmem:[#allocation4 + $0xe0] sm:$0xff]
    %v55 = vld [vmem:[#allocation4 + $0xe8] sm:$0xff]
    %v56 = vld [vmem:[#allocation4 + $0xf0] sm:$0xff]
    %v57 = vld [vmem:[#allocation4 + $0xf8] sm:$0xff]
    %v58 = vld [vmem:[#allocation4 + $0x100] sm:$0xff]
    %v59 = vld [vmem:[#allocation4 + $0x108] sm:$0xff]
    %v60 = vld [vmem:[#allocation4 + $0x110] sm:$0xff]
    %v61 = vld [vmem:[#allocation4 + $0x118] sm:$0xff]
    %v62 = vld [vmem:[#allocation4 + $0x120] sm:$0xff]
    %v63 = vld [vmem:[#allocation4 + $0x128] sm:$0xff]
    %v64 = vld [vmem:[#allocation4 + $0x130] sm:$0xff]
    %v65 = vld [vmem:[#allocation4 + $0x138] sm:$0xff]
    %v66 = vld [vmem:[#allocation4 + $0x140] sm:$0xff]
    %v67 = vld [vmem:[#allocation4 + $0x148] sm:$0xff]
    %v68 = vld [vmem:[#allocation4 + $0x150] sm:$0xff]
    %v69 = vld [vmem:[#allocation4 + $0x158] sm:$0xff]
    %v70 = vld [vmem:[#allocation4 + $0x160] sm:$0xff]
    %v71 = vld [vmem:[#allocation4 + $0x168] sm:$0xff]
    %v72 = vld [vmem:[#allocation4 + $0x170] sm:$0xff]
    %v73 = vld [vmem:[#allocation4 + $0x178] sm:$0xff]
    %v74 = vld [vmem:[#allocation4 + $0x180] sm:$0xff]
    %v75 = vld [vmem:[#allocation4 + $0x188] sm:$0xff]
    %v76 = vld [vmem:[#allocation4 + $0x190] sm:$0xff]
    %v77 = vld [vmem:[#allocation4 + $0x198] sm:$0xff]
    %v78 = vld [vmem:[#allocation4 + $0x1a0] sm:$0xff]
    %v79 = vld [vmem:[#allocation4 + $0x1a8] sm:$0xff]
    %v80 = vld [vmem:[#allocation4 + $0x1b0] sm:$0xff]
    %v81 = vld [vmem:[#allocation4 + $0x1b8] sm:$0xff]
    %v82 = vld [vmem:[#allocation4 + $0x1c0] sm:$0xff]
    %v83 = vld [vmem:[#allocation4 + $0x1c8] sm:$0xff]
    %v84 = vld [vmem:[#allocation4 + $0x1d0] sm:$0xff]
    %v85 = vld [vmem:[#allocation4 + $0x1d8] sm:$0xff]
    %v86 = vld [vmem:[#allocation4 + $0x1e0] sm:$0xff]
    %v87 = vld [vmem:[#allocation4 + $0x1e8] sm:$0xff]
    %v88 = vld [vmem:[#allocation4 + $0x1f0] sm:$0xff]
    %v89 = vld [vmem:[#allocation4 + $0x1f8] sm:$0xff]
    %v90 = vstv %s25
    %v91 = vmul.f32 %v26, %v90
    %v92 = vmul.f32 %v27, %v90
    %v93 = vmul.f32 %v28, %v90
    %v94 = vmul.f32 %v29, %v90
    %v95 = vmul.f32 %v30, %v90
    %v96 = vmul.f32 %v31, %v90
    %v97 = vmul.f32 %v32, %v90
    %v98 = vmul.f32 %v33, %v90
    %v99 = vmul.f32 %v34, %v90
    %v100 = vmul.f32 %v35, %v90
    %v101 = vmul.f32 %v36, %v90
    %v102 = vmul.f32 %v37, %v90
    %v103 = vmul.f32 %v38, %v90
    %v104 = vmul.f32 %v39, %v90
    %v105 = vmul.f32 %v40, %v90
    %v106 = vmul.f32 %v41, %v90
    %v107 = vmul.f32 %v42, %v90
    %v108 = vmul.f32 %v43, %v90
    %v109 = vmul.f32 %v44, %v90
    %v110 = vmul.f32 %v45, %v90
    %v111 = vmul.f32 %v46, %v90
    %v112 = vmul.f32 %v47, %v90
    %v113 = vmul.f32 %v48, %v90
    %v114 = vmul.f32 %v49, %v90
    %v115 = vmul.f32 %v50, %v90
    %v116 = vmul.f32 %v51, %v90
    %v117 = vmul.f32 %v52, %v90
    %v118 = vmul.f32 %v53, %v90
    %v119 = vmul.f32 %v54, %v90
    %v120 = vmul.f32 %v55, %v90
    %v121 = vmul.f32 %v56, %v90
    %v122 = vmul.f32 %v57, %v90
    %v123 = vmul.f32 %v58, %v90
    %v124 = vmul.f32 %v59, %v90
    %v125 = vmul.f32 %v60, %v90
    %v126 = vmul.f32 %v61, %v90
    %v127 = vmul.f32 %v62, %v90
    %v128 = vmul.f32 %v63, %v90
    %v129 = vmul.f32 %v64, %v90
    %v130 = vmul.f32 %v65, %v90
    %v131 = vmul.f32 %v66, %v90
    %v132 = vmul.f32 %v67, %v90
    %v133 = vmul.f32 %v68, %v90
    %v134 = vmul.f32 %v69, %v90
    %v135 = vmul.f32 %v70, %v90
    %v136 = vmul.f32 %v71, %v90
    %v137 = vmul.f32 %v72, %v90
    %v138 = vmul.f32 %v73, %v90
    %v139 = vmul.f32 %v74, %v90
    %v140 = vmul.f32 %v75, %v90
    %v141 = vmul.f32 %v76, %v90
    %v142 = vmul.f32 %v77, %v90
    %v143 = vmul.f32 %v78, %v90
    %v144 = vmul.f32 %v79, %v90
    %v145 = vmul.f32 %v80, %v90
    %v146 = vmul.f32 %v81, %v90
    %v147 = vmul.f32 %v82, %v90
    %v148 = vmul.f32 %v83, %v90
    %v149 = vmul.f32 %v84, %v90
    %v150 = vmul.f32 %v85, %v90
    %v151 = vmul.f32 %v86, %v90
    %v152 = vmul.f32 %v87, %v90
    %v153 = vmul.f32 %v88, %v90
    %v154 = vmul.f32 %v89, %v90
    %155 = vst [vmem:[#allocation7] sm:$0xff] %v91
    %156 = vst [vmem:[#allocation7 + $0x8] sm:$0xff] %v92
    %157 = vst [vmem:[#allocation7 + $0x10] sm:$0xff] %v93
    %158 = vst [vmem:[#allocation7 + $0x18] sm:$0xff] %v94
    %159 = vst [vmem:[#allocation7 + $0x20] sm:$0xff] %v95
    %160 = vst [vmem:[#allocation7 + $0x28] sm:$0xff] %v96
    %161 = vst [vmem:[#allocation7 + $0x30] sm:$0xff] %v97
    %162 = vst [vmem:[#allocation7 + $0x38] sm:$0xff] %v98
    %163 = vst [vmem:[#allocation7 + $0x40] sm:$0xff] %v99
    %164 = vst [vmem:[#allocation7 + $0x48] sm:$0xff] %v100
    %165 = vst [vmem:[#allocation7 + $0x50] sm:$0xff] %v101
    %166 = vst [vmem:[#allocation7 + $0x58] sm:$0xff] %v102
    %167 = vst [vmem:[#allocation7 + $0x60] sm:$0xff] %v103
    %168 = vst [vmem:[#allocation7 + $0x68] sm:$0xff] %v104
    %169 = vst [vmem:[#allocation7 + $0x70] sm:$0xff] %v105
    %170 = vst [vmem:[#allocation7 + $0x78] sm:$0xff] %v106
    %171 = vst [vmem:[#allocation7 + $0x80] sm:$0xff] %v107
    %172 = vst [vmem:[#allocation7 + $0x88] sm:$0xff] %v108
    %173 = vst [vmem:[#allocation7 + $0x90] sm:$0xff] %v109
    %174 = vst [vmem:[#allocation7 + $0x98] sm:$0xff] %v110
    %175 = vst [vmem:[#allocation7 + $0xa0] sm:$0xff] %v111
    %176 = vst [vmem:[#allocation7 + $0xa8] sm:$0xff] %v112
    %177 = vst [vmem:[#allocation7 + $0xb0] sm:$0xff] %v113
    %178 = vst [vmem:[#allocation7 + $0xb8] sm:$0xff] %v114
    %179 = vst [vmem:[#allocation7 + $0xc0] sm:$0xff] %v115
    %180 = vst [vmem:[#allocation7 + $0xc8] sm:$0xff] %v116
    %181 = vst [vmem:[#allocation7 + $0xd0] sm:$0xff] %v117
    %182 = vst [vmem:[#allocation7 + $0xd8] sm:$0xff] %v118
    %183 = vst [vmem:[#allocation7 + $0xe0] sm:$0xff] %v119
    %184 = vst [vmem:[#allocation7 + $0xe8] sm:$0xff] %v120
    %185 = vst [vmem:[#allocation7 + $0xf0] sm:$0xff] %v121
    %186 = vst [vmem:[#allocation7 + $0xf8] sm:$0xff] %v122
    %187 = vst [vmem:[#allocation7 + $0x100] sm:$0xff] %v123
    %188 = vst [vmem:[#allocation7 + $0x108] sm:$0xff] %v124
    %189 = vst [vmem:[#allocation7 + $0x110] sm:$0xff] %v125
    %190 = vst [vmem:[#allocation7 + $0x118] sm:$0xff] %v126
    %191 = vst [vmem:[#allocation7 + $0x120] sm:$0xff] %v127
    %192 = vst [vmem:[#allocation7 + $0x128] sm:$0xff] %v128
    %193 = vst [vmem:[#allocation7 + $0x130] sm:$0xff] %v129
    %194 = vst [vmem:[#allocation7 + $0x138] sm:$0xff] %v130
    %195 = vst [vmem:[#allocation7 + $0x140] sm:$0xff] %v131
    %196 = vst [vmem:[#allocation7 + $0x148] sm:$0xff] %v132
    %197 = vst [vmem:[#allocation7 + $0x150] sm:$0xff] %v133
    %198 = vst [vmem:[#allocation7 + $0x158] sm:$0xff] %v134
    %199 = vst [vmem:[#allocation7 + $0x160] sm:$0xff] %v135
    %200 = vst [vmem:[#allocation7 + $0x168] sm:$0xff] %v136
    %201 = vst [vmem:[#allocation7 + $0x170] sm:$0xff] %v137
    %202 = vst [vmem:[#allocation7 + $0x178] sm:$0xff] %v138
    %203 = vst [vmem:[#allocation7 + $0x180] sm:$0xff] %v139
    %204 = vst [vmem:[#allocation7 + $0x188] sm:$0xff] %v140
    %205 = vst [vmem:[#allocation7 + $0x190] sm:$0xff] %v141
    %206 = vst [vmem:[#allocation7 + $0x198] sm:$0xff] %v142
    %207 = vst [vmem:[#allocation7 + $0x1a0] sm:$0xff] %v143
    %208 = vst [vmem:[#allocation7 + $0x1a8] sm:$0xff] %v144
    %209 = vst [vmem:[#allocation7 + $0x1b0] sm:$0xff] %v145
    %210 = vst [vmem:[#allocation7 + $0x1b8] sm:$0xff] %v146
    %211 = vst [vmem:[#allocation7 + $0x1c0] sm:$0xff] %v147
    %212 = vst [vmem:[#allocation7 + $0x1c8] sm:$0xff] %v148
    %213 = vst [vmem:[#allocation7 + $0x1d0] sm:$0xff] %v149
    %214 = vst [vmem:[#allocation7 + $0x1d8] sm:$0xff] %v150
    %215 = vst [vmem:[#allocation7 + $0x1e0] sm:$0xff] %v151
    %216 = vst [vmem:[#allocation7 + $0x1e8] sm:$0xff] %v152
    %217 = vst [vmem:[#allocation7 + $0x1f0] sm:$0xff] %v153
    %218 = vst [vmem:[#allocation7 + $0x1f8] sm:$0xff] %v154
    // Predicated region
    $region10: #{tpu_custom_call.1} parent=1 // pred_check
      _
    $region11: #{tpu_custom_call.1} parent=1 // pred_check_branch
      %220 = sbr.rel (0) target = $region13
    $region12: #{tpu_custom_call.1} parent=1 // pred_region
      %s222 = ssub.s32 8192, 8192
      %223 = vsyncadd [#allocation6], %s222
      %s224 = sshll.u32 [#allocation7], 4
      %s225 = int_to_ptr.vmem [resolvable:$true] %s224
      %230 = dma.vmem_to_hbm [thread:$0]  %s225, 8192, %s2, [#allocation6], 1024, 1024, 64
    $region13: #{tpu_custom_call.1} parent=1 // pred_fallthru
      _
    // Predicated region
    $region14: #{tpu_custom_call.1} parent=1 // pred_check
      _
    $region15: #{tpu_custom_call.1} parent=1 // pred_check_branch
      %232 = sbr.rel (0) target = $region17
    $region16: #{tpu_custom_call.1} parent=1 // pred_region
      %233 = dma.done [#allocation6], 8192
    $region17: #{tpu_custom_call.1} parent=1 // pred_fallthru
      _
    %234 = vsyncpa [#allocation5], 1
    %235 = vsyncpa [#allocation6], 1

</llo_original>
